<compile_context>
chip_gen: v5e
topology: v5e:2x2
jax: 0.10.0
libtpu: 0.0.40
codegen_flags: <defaults>
</compile_context>

<pallas_src>
import jax
import jax.numpy as jnp
import numpy as np
from jax.experimental import pallas as pl
from jax.experimental.pallas import tpu as pltpu


def _frg_kernel(sampled_ref, target_ref, out_ref):
    # sampled_ref: (1, TS, C)       sampled source feature vectors (conv weights)
    # target_ref : (1, C, THW)      target feature map tile, spatial flattened
    # out_ref    : (1, TS, THW)     cosine-distance (correlation) map tile
    s = sampled_ref[0]                        # (TS, C)
    t = target_ref[0]                         # (C, THW)
    out_ref[0] = jnp.dot(
        s, t, preferred_element_type=jnp.float32
    ).astype(out_ref.dtype)


def _pick_tiles(S, C, HW, in_bytes, out_bytes, vmem_budget=36 << 20):
    """Pick (TILE_S, TILE_HW) that fit a conservative cross-generation VMEM budget."""
    # Tile S only when it is large; tile must divide S (and be a multiple of 8).
    tile_s = S
    if S >= 256:
        for cand in (256, 128):
            if S % cand == 0:
                tile_s = cand
                break

    # If HW is not a multiple of 128 we cannot tile the lane axis cleanly;
    # fall back to a full spatial block (block dim == full array dim is legal).
    if HW % 128 != 0:
        return tile_s, HW

    # Double-buffered target + output tiles plus the resident sampled weights.
    per_col = 2 * (C * in_bytes + tile_s * out_bytes)
    resident = 2 * tile_s * C * in_bytes
    max_cols = max((vmem_budget - resident) // per_col, 128)
    tile_hw = min(HW, 8192, (max_cols // 128) * 128)
    tile_hw = max(tile_hw, 128)
    # Prefer a tile that divides HW evenly to avoid remainder/masking issues.
    while HW % tile_hw != 0 and tile_hw > 128:
        tile_hw -= 128
    if HW % tile_hw != 0:
        tile_hw = HW
    return tile_s, tile_hw


def feature_response_generator_no_soft_thresholding(
    source_feature_map, target_feature_map, source_feature_1D_locations, boundaries
):
    del boundaries  # unused in the reference forward pass
    B, C, H, W = source_feature_map.shape
    _, S, _ = source_feature_1D_locations.shape
    HW = H * W

    out_dtype = jnp.promote_types(source_feature_map.dtype, target_feature_map.dtype)

    # --- glue (pure indexing / reshape): gather the sampled feature vectors ---
    # Equivalent of torch.gather over the flattened spatial axis (.long() truncates).
    src_flat = source_feature_map.reshape(B, C, HW)
    locs = source_feature_1D_locations.reshape(B, 1, S).astype(jnp.int32)
    locs = jnp.broadcast_to(locs, (B, C, S))
    sampled = jnp.take_along_axis(src_flat, locs, axis=2)        # (B, C, S)
    sampled = jnp.transpose(sampled, (0, 2, 1))                  # (B, S, C)
    # TODO(synk): gather could be moved in-kernel via PrefetchScalarGridSpec +
    # manual DMA from an HBM-resident source map; kept in the wrapper since the
    # sampled tensor is only B*S*C elements (non-binding).

    tgt_flat = target_feature_map.reshape(B, C, HW)              # (B, C, HW)

    in_bytes = jnp.dtype(target_feature_map.dtype).itemsize
    out_bytes = jnp.dtype(out_dtype).itemsize
    tile_s, tile_hw = _pick_tiles(S, C, HW, in_bytes, out_bytes)

    grid = (B, S // tile_s, HW // tile_hw)

    # --- hot path: per-batch 1x1 conv as a tiled Pallas matmul kernel ---
    out_flat = pl.pallas_call(
        _frg_kernel,
        out_shape=jax.ShapeDtypeStruct((B, S, HW), out_dtype),
        grid=grid,
        in_specs=[
            # Sampled weights: resident across the HW axis (block index constant).
            pl.BlockSpec((1, tile_s, C), lambda b, si, hi: (b, si, 0)),
            # Target map: streamed in lane-dense spatial tiles.
            pl.BlockSpec((1, C, tile_hw), lambda b, si, hi: (b, 0, hi)),
        ],
        out_specs=pl.BlockSpec((1, tile_s, tile_hw), lambda b, si, hi: (b, si, hi)),
        compiler_params=pltpu.CompilerParams(
            dimension_semantics=("parallel", "parallel", "parallel"),
            vmem_limit_bytes=48 * 1024 * 1024,
        ),
    )(sampled, tgt_flat)

    return out_flat.reshape(B, S, H, W)


def _reference_jax(source, target, locs):
    # Pure-JAX reference mirroring the PyTorch forward, for verification.
    B, C, H, W = source.shape
    _, S, _ = locs.shape
    HW = H * W
    src_flat = source.reshape(B, C, HW)
    idx = jnp.broadcast_to(locs.reshape(B, 1, S).astype(jnp.int32), (B, C, S))
    sampled = jnp.take_along_axis(src_flat, idx, axis=2)         # (B, C, S)
    sampled = jnp.transpose(sampled, (0, 2, 1))                  # (B, S, C)
    out = jnp.einsum("bsc,bchw->bshw", sampled, target)
    return out


if __name__ == "__main__":
    # Small shapes consistent with the module's forward.
    B, C, H, W, S = 2, 4, 16, 16, 8

    key = jax.random.PRNGKey(0)
    k1, k2, k3 = jax.random.split(key, 3)
    source = jax.random.normal(k1, (B, C, H, W), dtype=jnp.float32)
    target = jax.random.normal(k2, (B, C, H, W), dtype=jnp.float32)
    locs = jax.random.randint(k3, (B, S, 1), 0, H * W).astype(jnp.float32)
    boundaries = jnp.ones((B, 1, H, W), dtype=jnp.float32)  # unused, as in torch

    out = feature_response_generator_no_soft_thresholding(
        source, target, locs, boundaries
    )
    out = jax.block_until_ready(out)

    ref = _reference_jax(source, target, locs)
    assert out.shape == (B, S, H, W)
    np.testing.assert_allclose(np.asarray(out), np.asarray(ref), rtol=1e-5, atol=1e-5)

    print("KERNEL_OK")
</pallas_src>

<mosaic_0001>
module attributes {stable_mosaic.version = 11 : i64} {
  func.func @_frg_kernel(%arg0: i32, %arg1: i32, %arg2: i32, %arg3: memref<1x8x4xf32, #tpu.memory_space<vmem>>, %arg4: memref<1x4x256xf32, #tpu.memory_space<vmem>>, %arg5: memref<1x8x256xf32, #tpu.memory_space<vmem>>) attributes {dimension_semantics = [#tpu.dimension_semantics<parallel>, #tpu.dimension_semantics<parallel>, #tpu.dimension_semantics<parallel>], iteration_bounds = array<i64: 2, 1, 1>, scalar_prefetch = 0 : i64, scratch_operands = 0 : i64, tpu.core_type = #tpu.core_type<tc>, window_params = [{transform_indices = @transform_0, window_bounds = array<i64: 1, 8, 4>}, {transform_indices = @transform_1, window_bounds = array<i64: 1, 4, 256>}, {transform_indices = @transform_2, window_bounds = array<i64: 1, 8, 256>}]} {
    %c0 = arith.constant 0 : index
    %c0_0 = arith.constant 0 : index
    %c0_1 = arith.constant 0 : index
    %0 = vector.load %arg3[%c0, %c0_0, %c0_1] : memref<1x8x4xf32, #tpu.memory_space<vmem>>, vector<1x8x4xf32>
    %1 = vector.shape_cast %0 : vector<1x8x4xf32> to vector<8x4xf32>
    %c0_2 = arith.constant 0 : index
    %c0_3 = arith.constant 0 : index
    %c0_4 = arith.constant 0 : index
    %2 = vector.load %arg4[%c0_2, %c0_3, %c0_4] : memref<1x4x256xf32, #tpu.memory_space<vmem>>, vector<1x4x256xf32>
    %3 = vector.shape_cast %2 : vector<1x4x256xf32> to vector<4x256xf32>
    %cst = arith.constant dense<0.000000e+00> : vector<8x256xf32>
    %4 = tpu.matmul %1, %3, %cst {dimension_numbers = #tpu.dot_dimension_numbers<[1], [0], [0], [1], [0, 0, 1, 1], [], []>} : vector<8x4xf32>, vector<4x256xf32>, vector<8x256xf32> -> vector<8x256xf32>
    %c0_5 = arith.constant 0 : index
    %c0_6 = arith.constant 0 : index
    %c0_7 = arith.constant 0 : index
    %5 = vector.load %arg5[%c0_5, %c0_6, %c0_7] : memref<1x8x256xf32, #tpu.memory_space<vmem>>, vector<1x8x256xf32>
    %6 = vector.shape_cast %5 : vector<1x8x256xf32> to vector<8x256xf32>
    %7 = vector.shape_cast %4 : vector<8x256xf32> to vector<1x8x256xf32>
    tpu.vector_store %arg5[%c0_5, %c0_6, %c0_7], %7 {strides = array<i32>} : memref<1x8x256xf32, #tpu.memory_space<vmem>>, vector<1x8x256xf32>,
    return
  }
  func.func @transform_0(%arg0: i32, %arg1: i32, %arg2: i32) -> (i32, i32, i32) {
    %c0_i32 = arith.constant 0 : i32
    %c0_i32_0 = arith.constant 0 : i32
    return %arg0, %arg1, %c0_i32 : i32, i32, i32
  }
  func.func @transform_1(%arg0: i32, %arg1: i32, %arg2: i32) -> (i32, i32, i32) {
    %c0_i32 = arith.constant 0 : i32
    %c0_i32_0 = arith.constant 0 : i32
    return %arg0, %c0_i32, %arg2 : i32, i32, i32
  }
  func.func @transform_2(%arg0: i32, %arg1: i32, %arg2: i32) -> (i32, i32, i32) {
    %c0_i32 = arith.constant 0 : i32
    return %arg0, %arg1, %arg2 : i32, i32, i32
  }
}

</mosaic_0001>

<llo_original>
// kernel: tpu_custom_call.1
$region0: #{tpu_custom_call.1}
  #allocation0 [shape = 'u32[]', space=smem, size = 0x4, offset = 0x4, fixed_abs, tag = 'smem constant byte address 0x4 - core index']
  #allocation1 [shape = 'u32[72,128]{1,0:T(1,128)}', space=vmem, size = 0x9000, scoped, tag = 'internal scratch']
  %s0 = inlined_call_operand.vmem [shape: f32[2,8,4], index: 0, kind: input, shape index: {}]
  %s1 = inlined_call_operand.vmem [shape: f32[2,4,256], index: 1, kind: input, shape index: {}]
  %s2 = inlined_call_operand.hbm [shape: f32[2,8,256], index: 2, kind: output, shape index: {}]
  %s3 = sld [smem:[#allocation0]]
  $region41: #{tpu_custom_call.1} parent=0
    _
  %s5 = ssub.s32 1, %s3
  %s6 = scalar_select 0, %s5, %s3
  $region1: #{tpu_custom_call.1} parent=0
    #allocation2 [shape = 'u8[16384]{0}', space=vmem, size = 0x4000, scoped, tag = 'output window, operand 0']
    #allocation3 [shape = 's32[2]{0}', space=sflag, size = 0x8, scoped, tag = 'scoped memory for tpu_custom_call.1']
    %7 = vsyncpa [#allocation3], 0
    %s8 = scalar_lea.sflag [#allocation3], 1
    %9 = vsyncpa %s8, 0
    loop: start=0, step=1, limit=4
    $region2: #{tpu_custom_call.1} parent=1 // loop_pre_header
      _
    $region3: #{tpu_custom_call.1} parent=1 // loop_header
      %s11 = sphi 0, %s15
      %p12 = scmp.ge.s32.totalorder %s11, 4
      %s18 = sphi 0, %s37
      %s19 = sphi 0, %s33
      %s20 = sphi 0, %s29
      %s21 = sphi 0, %s18
      %s22 = sphi 0, %s19
      %s23 = sphi 0, %s20
      %s24 = sphi 0, %s21
      %s25 = sphi 0, %s22
      %s26 = sphi 0, %s23
      %s42 = sphi 0, %s44
      %s45 = sphi 0, %s42
      %s46 = sphi 0, %s45
      %s62 = sphi 0, %s46
      %s70 = sphi 0, %s72
      %s73 = sphi 0, %s70
      %s74 = sphi 0, %s73
      %s90 = sphi 0, %s74
      %s100 = sphi 0, %s102
      %s103 = sphi 0, %s100
      %s104 = sphi 0, %s103
      %s120 = sphi 0, %s104
    $region4: #{tpu_custom_call.1} parent=1 // loop_header_branch
      %14 = sbr.rel (%p12) target = $region8
    $region5: #{tpu_custom_call.1} parent=1 // loop_body
      %s16 = ssub.s32 %s11, 1
      %s17 = ssub.s32 %s11, 2
      %s27 = sadd.s32 1, %s20
      %p28 = scmp.ge.s32.totalorder %s27, 1
      %s29 = scalar_select %p28, 0, %s27
      %s30 = sadd.s32 1, %s19
      %s31 = scalar_select %p28, %s30, %s19
      %p32 = scmp.ge.s32.totalorder %s31, 1
      %s33 = scalar_select %p32, 0, %s31
      %s34 = sadd.s32 1, %s18
      %s35 = scalar_select %p32, %s34, %s18
      %p36 = scmp.ge.s32.totalorder %s35, 2
      %s37 = scalar_select %p36, 0, %s35
      %s38 = ssub.s32 %s18, %s37
      %s39 = ssub.s32 %s19, %s33
      %s40 = sor.u32 %s38, %s39
      %p41 = scmp.eq.s32.totalorder %s40, 0
      %s43 = sadd.s32 %s42, 1
      %s44 = scalar_select %p41, %s42, %s43
      %p47 = pneg %p41
      %p48 = scmp.eq.s32.totalorder %s11, 1
      %p49 = por %p47, %p48
      %p50 = scmp.ne.s32.totalorder %s42, %s45
      %p51 = scmp.eq.s32.totalorder %s11, 0
      %p52 = por %p50, %p51
      %p53 = scmp.ne.s32.totalorder %s42, %s45
      %p54 = scmp.eq.s32.totalorder %s16, 1
      %p55 = por %p53, %p54
      %p56 = scmp.ne.s32.totalorder %s45, %s46
      %p57 = scmp.eq.s32.totalorder %s16, 0
      %p58 = por %p56, %p57
      %p59 = scmp.ne.s32.totalorder %s45, %s46
      %p60 = scmp.eq.s32.totalorder %s17, 1
      %p61 = por %p59, %p60
      %p63 = scmp.ne.s32.totalorder %s46, %s62
      %p64 = scmp.eq.s32.totalorder %s17, 0
      %p65 = por %p63, %p64
      %s66 = ssub.s32 %s18, %s37
      %s67 = ssub.s32 %s20, %s29
      %s68 = sor.u32 %s66, %s67
      %p69 = scmp.eq.s32.totalorder %s68, 0
      %s71 = sadd.s32 %s70, 1
      %s72 = scalar_select %p69, %s70, %s71
      %p75 = pneg %p69
      %p76 = scmp.eq.s32.totalorder %s11, 1
      %p77 = por %p75, %p76
      %p78 = scmp.ne.s32.totalorder %s70, %s73
      %p79 = scmp.eq.s32.totalorder %s11, 0
      %p80 = por %p78, %p79
      %p81 = scmp.ne.s32.totalorder %s70, %s73
      %p82 = scmp.eq.s32.totalorder %s16, 1
      %p83 = por %p81, %p82
      %p84 = scmp.ne.s32.totalorder %s73, %s74
      %p85 = scmp.eq.s32.totalorder %s16, 0
      %p86 = por %p84, %p85
      %p87 = scmp.ne.s32.totalorder %s73, %s74
      %p88 = scmp.eq.s32.totalorder %s17, 1
      %p89 = por %p87, %p88
      %p91 = scmp.ne.s32.totalorder %s74, %s90
      %p92 = scmp.eq.s32.totalorder %s17, 0
      %p93 = por %p91, %p92
      %s94 = ssub.s32 %s18, %s37
      %s95 = ssub.s32 %s19, %s33
      %s96 = sor.u32 %s94, %s95
      %s97 = ssub.s32 %s20, %s29
      %s98 = sor.u32 %s96, %s97
      %p99 = scmp.eq.s32.totalorder %s98, 0
      %s101 = sadd.s32 %s100, 1
      %s102 = scalar_select %p99, %s100, %s101
      %p105 = pneg %p99
      %p106 = scmp.eq.s32.totalorder %s11, 1
      %p107 = por %p105, %p106
      %p108 = scmp.ne.s32.totalorder %s100, %s103
      %p109 = scmp.eq.s32.totalorder %s11, 0
      %p110 = por %p108, %p109
      %p111 = scmp.ne.s32.totalorder %s100, %s103
      %p112 = scmp.eq.s32.totalorder %s16, 1
      %p113 = por %p111, %p112
      %p114 = scmp.ne.s32.totalorder %s103, %s104
      %p115 = scmp.eq.s32.totalorder %s16, 0
      %p116 = por %p114, %p115
      %p117 = scmp.ne.s32.totalorder %s103, %s104
      %p118 = scmp.eq.s32.totalorder %s17, 1
      %p119 = por %p117, %p118
      %p121 = scmp.ne.s32.totalorder %s104, %s120
      %p122 = scmp.eq.s32.totalorder %s17, 0
      %p123 = por %p121, %p122
      %p124 = scmp.le.s32.totalorder 1, %s11
      %p125 = scmp.lt.s32.totalorder %s11, 3
      %p126 = pnand %p124, %p125
      %p127 = pneg %p126
      // Predicated region
      $region9: #{tpu_custom_call.1} parent=5 // pred_check
        _
      $region10: #{tpu_custom_call.1} parent=5 // pred_check_branch
        %129 = sbr.rel (%p126) target = $region12
      $region11: #{tpu_custom_call.1} parent=5 // pred_region
        %s130 = ssub.s32 %s11, 1
      $region12: #{tpu_custom_call.1} parent=5 // pred_fallthru
        _
      %p131 = scmp.lt.s32.totalorder %s11, 2
      // Predicated region
      $region13: #{tpu_custom_call.1} parent=5 // pred_check
        %p132 = pneg %p131
      $region14: #{tpu_custom_call.1} parent=5 // pred_check_branch
        %134 = sbr.rel (%p132) target = $region16
      $region15: #{tpu_custom_call.1} parent=5 // pred_region
        // Predicated region
        $region17: #{tpu_custom_call.1} parent=15 // pred_check
          %p135 = pneg %p52
        $region18: #{tpu_custom_call.1} parent=15 // pred_check_branch
          %137 = sbr.rel (%p135) target = $region20
        $region19: #{tpu_custom_call.1} parent=15 // pred_region
          %p138 = scmp.lt.s32.totalorder %s18, 1
          %s139 = scalar_select %p138, %s18, 1
          %p140 = scmp.lt.s32.totalorder %s19, 0
          %s141 = scalar_select %p140, %s19, 0
          %s142 = sadd.s32 %s141, %s139
          %s143 = smul.addr %s142, 8
          %s144 = scalar_lea.vmem %s0, %s143
        $region20: #{tpu_custom_call.1} parent=15 // pred_fallthru
          _
        // Predicated region
        $region21: #{tpu_custom_call.1} parent=15 // pred_check
          %p145 = pneg %p80
        $region22: #{tpu_custom_call.1} parent=15 // pred_check_branch
          %147 = sbr.rel (%p145) target = $region24
        $region23: #{tpu_custom_call.1} parent=15 // pred_region
          %s148 = smul.u32 2, %s20
          %p149 = scmp.lt.s32.totalorder %s18, 1
          %s150 = scalar_select %p149, %s18, 1
          %p151 = scmp.lt.s32.totalorder %s148, 1
          %s152 = scalar_select %p151, %s148, 1
          %s153 = smul.addr %s150, 2
          %s154 = sadd.s32 %s152, %s153
          %s155 = smul.addr %s154, 4
          %s156 = scalar_lea.vmem %s1, %s155
          %s157 = smul.u32 2, %s20
        $region24: #{tpu_custom_call.1} parent=15 // pred_fallthru
          _
      $region16: #{tpu_custom_call.1} parent=5 // pred_fallthru
        _
      %p158 = scmp.le.s32.totalorder 1, %s11
      %p159 = scmp.lt.s32.totalorder %s11, 3
      %p160 = pnand %p158, %p159
      %p161 = pneg %p160
      // Predicated region
      $region25: #{tpu_custom_call.1} parent=5 // pred_check
        _
      $region26: #{tpu_custom_call.1} parent=5 // pred_check_branch
        %163 = sbr.rel (%p160) target = $region28
      $region27: #{tpu_custom_call.1} parent=5 // pred_region
        %s164 = ssub.s32 %s11, 1
        %p165 = scmp.lt.s32.totalorder %s21, 1
        %s166 = scalar_select %p165, %s21, 1
        %p167 = scmp.lt.s32.totalorder %s22, 0
        %s168 = scalar_select %p167, %s22, 0
        %s169 = sadd.s32 %s168, %s166
        %s170 = smul.addr %s169, 8
        %s171 = scalar_lea.vmem %s0, %s170
        %p172 = pneg %p58
        %p173 = pneg %p55
        %s174 = smul.u32 2, %s23
        %p175 = scmp.lt.s32.totalorder %s21, 1
        %s176 = scalar_select %p175, %s21, 1
        %p177 = scmp.lt.s32.totalorder %s174, 1
        %s178 = scalar_select %p177, %s174, 1
        %s179 = smul.addr %s176, 2
        %s180 = sadd.s32 %s178, %s179
        %s181 = smul.addr %s180, 4
        %s182 = scalar_lea.vmem %s1, %s181
        %p183 = pneg %p86
        %p184 = pneg %p83
        %p185 = pneg %p116
        %p186 = pneg %p113
        %s187 = sand.u32 %s103, 1
        %s188 = scalar_lea.sflag [#allocation3], %s187
        %s189 = sand.u32 %s103, 1
        %s190 = smul.addr %s189, 16
        %s191 = scalar_lea.vmem [#allocation2], %s190
        %p192 = scmp.lt.s32.totalorder %s21, 1
        %s193 = scalar_select %p192, %s21, 1
        %p194 = scmp.lt.s32.totalorder %s22, 0
        %s195 = scalar_select %p194, %s22, 0
        %s196 = sadd.s32 %s195, %s193
        %s197 = smul.addr %s196, 8
        %s198 = scalar_lea.vmem %s0, %s197
        %s199 = smul.u32 2, %s23
        %p200 = scmp.lt.s32.totalorder %s21, 1
        %s201 = scalar_select %p200, %s21, 1
        %p202 = scmp.lt.s32.totalorder %s199, 1
        %s203 = scalar_select %p202, %s199, 1
        %s204 = smul.addr %s201, 2
        %s205 = sadd.s32 %s203, %s204
        %s206 = smul.addr %s205, 4
        %s207 = scalar_lea.vmem %s1, %s206
        %s208 = smul.u32 2, %s23
        %s209 = smul.u32 2, %s23
        %v210 = vld [vmem:[%s198] sm:$0xff]
        %v211 = vld [vmem:[%s207] sm:$0xff]
        %213 = vst [vmem:[#allocation1] ss:$2 sm:$0xff] %v211
        %v214 = vld.sshfl [vmem:[#allocation1] sm:$0xff pattern:$0x75316420]
        %v215 = vld.sshfl [vmem:[#allocation1 + $0x8] sm:$0xff pattern:$0x75316420]
        %vm216 = vcmask 31744
        %v218 = vsel %vm216, %v210, 0
        %vm220 = vcmask 1043456
        %v221 = vsel %vm220, %v214, 0
        %v223 = vsel %vm220, %v215, 0
        %225 = vmatpush.msra.mxu0 0.0
        %226 = vmatpush.msra.mxu0 0.0
        %227 = vmatpush.msra.mxu0 0.0
        %228 = vmatpush.msra.mxu0 0.0
        %229 = vmatpush.msra.mxu0 0.0
        %230 = vmatpush.msra.mxu0 0.0
        %231 = vmatpush.msra.mxu0 0.0
        %232 = vmatpush.msra.mxu0 0.0
        %233 = vmatpush.msra.mxu0 0.0
        %234 = vmatpush.msra.mxu0 0.0
        %235 = vmatpush.msra.mxu0 0.0
        %236 = vmatpush.msra.mxu0 0.0
        %237 = vmatpush.msra.mxu0 0.0
        %238 = vmatpush.msra.mxu0 0.0
        %239 = vmatpush.msra.mxu0 0.0
        %240 = vmatpush.msra.mxu0 %v221
        %241 = vmatmul.f32.gmra.mxu0 %v218
        %v242 = vpop.f32.mrf.mxu0
        %v243 = vadd.f32 0.0, %v242
        %244 = vdwg.mxu0
        %245 = vmatpush.msra.mxu0 0.0
        %246 = vmatpush.msra.mxu0 0.0
        %247 = vmatpush.msra.mxu0 0.0
        %248 = vmatpush.msra.mxu0 0.0
        %249 = vmatpush.msra.mxu0 0.0
        %250 = vmatpush.msra.mxu0 0.0
        %251 = vmatpush.msra.mxu0 0.0
        %252 = vmatpush.msra.mxu0 0.0
        %253 = vmatpush.msra.mxu0 0.0
        %254 = vmatpush.msra.mxu0 0.0
        %255 = vmatpush.msra.mxu0 0.0
        %256 = vmatpush.msra.mxu0 0.0
        %257 = vmatpush.msra.mxu0 0.0
        %258 = vmatpush.msra.mxu0 0.0
        %259 = vmatpush.msra.mxu0 0.0
        %260 = vmatpush.msra.mxu0 %v223
        %261 = vmatmul.f32.gmra.mxu0 %v218
        %v262 = vpop.f32.mrf.mxu0
        %v263 = vadd.f32 0.0, %v262
        %264 = vdwg.mxu0
        %265 = vst [vmem:[%s191] sm:$0xff] %v243
        %266 = vst [vmem:[%s191 + $0x8] sm:$0xff] %v263
        %s267 = sand.u32 %s103, 1
        %s268 = scalar_lea.sflag [#allocation3], %s267
        %s269 = sand.u32 %s103, 1
        %s270 = smul.addr %s269, 16
        %s271 = scalar_lea.vmem [#allocation2], %s270
        // Predicated region
        $region29: #{tpu_custom_call.1} parent=27 // pred_check
          %p272 = pneg %p113
        $region30: #{tpu_custom_call.1} parent=27 // pred_check_branch
          %274 = sbr.rel (%p272) target = $region32
        $region31: #{tpu_custom_call.1} parent=27 // pred_region
          %s275 = smul.u32 2, %s23
          %277 = vsyncadd %s268, 0
          %s278 = smul.addr %s22, 2
          %s279 = sadd.s32 %s275, %s278
          %s280 = smul.addr %s21, 2
          %s281 = sadd.s32 %s279, %s280
          %s282 = smul.addr %s281, 8
          %s283 = scalar_lea.hbm %s2, %s282
          %s285 = sshll.u32 %s271, 4
          %s286 = int_to_ptr.vmem [resolvable:$true] %s285
          %s287 = sshll.u32 %s283, 4
          %s288 = int_to_ptr.hbm [resolvable:$true] %s287
          %290 = dma.vmem_to_hbm [thread:$0]  %s286, 256, %s288, %s268
        $region32: #{tpu_custom_call.1} parent=27 // pred_fallthru
          _
      $region28: #{tpu_custom_call.1} parent=5 // pred_fallthru
        _
      %p291 = scmp.le.s32.totalorder 2, %s11
      // Predicated region
      $region33: #{tpu_custom_call.1} parent=5 // pred_check
        %p292 = pneg %p291
      $region34: #{tpu_custom_call.1} parent=5 // pred_check_branch
        %294 = sbr.rel (%p292) target = $region36
      $region35: #{tpu_custom_call.1} parent=5 // pred_region
        %s295 = ssub.s32 %s11, 2
        // Predicated region
        $region37: #{tpu_custom_call.1} parent=35 // pred_check
          %p296 = pneg %p119
        $region38: #{tpu_custom_call.1} parent=35 // pred_check_branch
          %298 = sbr.rel (%p296) target = $region40
        $region39: #{tpu_custom_call.1} parent=35 // pred_region
          %s299 = sand.u32 %s104, 1
          %s300 = scalar_lea.sflag [#allocation3], %s299
          %s301 = sand.u32 %s104, 1
          %s302 = smul.addr %s301, 16
          %s303 = scalar_lea.vmem [#allocation2], %s302
          %305 = dma.done %s300, 256
        $region40: #{tpu_custom_call.1} parent=35 // pred_fallthru
          _
      $region36: #{tpu_custom_call.1} parent=5 // pred_fallthru
        _
    $region6: #{tpu_custom_call.1} parent=1 // loop_footer
      %s15 = sadd.s32 1, %s11
    $region7: #{tpu_custom_call.1} parent=1 // loop_footer_branch
      %10 = sbr.rel target = $region3
    $region8: #{tpu_custom_call.1} parent=1 // loop_exit
      _
    %306 = vsyncpa [#allocation3], 1
    %s307 = scalar_lea.sflag [#allocation3], 1
    %308 = vsyncpa %s307, 1

</llo_original>
